<compile_context>
chip_gen: v7x
topology: tpu7x:2x2x1
jax: 0.10.0
libtpu: 0.0.40
codegen_flags: <defaults>
</compile_context>

<pallas_src>
import jax
import jax.numpy as jnp
from jax.experimental import pallas as pl
from jax.experimental.pallas import tpu as pltpu

HID = 128        # hidden width of affine1
HEAD_W = 8       # fused head slab width (col 0 = action-logit diff, col 1 = value)
OUT_W = 8        # narrow output slab width (col 0 = p0, col 1 = p1, col 2 = value)
MAX_TILE = 2048  # batch tile cap (per-step VMEM ~4 MiB incl. double buffers)
SPLIT_MIN = 256  # single-tile batches >= this are split in two (v7x: both TCs)


def policy_kernel(x_ref, w1_ref, b1_ref, wh_ref, bh_ref, out_ref):
    TB = x_ref.shape[0]

    # ---- affine1 + ReLU: K=4 contraction done as 4 VPU broadcast-FMAs ----
    x = x_ref[...]                                   # (TB, 4)
    w1 = w1_ref[...]                                 # (4, HID)
    h = jnp.broadcast_to(b1_ref[...], (TB, HID))     # bias, sublane-broadcast
    for k in range(4):                               # static unroll, K = 4
        h = h + x[:, k:k + 1] * w1[k:k + 1, :]
    h = jnp.maximum(h, 0.0)

    # ---- fused heads: one narrow (HID, 8) MXU matmul + folded bias ----
    # col 0 = action logit difference (a0 - a1), col 1 = value, rest zero.
    s = jnp.dot(h, wh_ref[...], preferred_element_type=jnp.float32) + bh_ref[...]

    # ---- exact 2-class softmax via sigmoid of pre-folded logit diff ----
    p0 = pl.reciprocal(1.0 + jnp.exp(-s[:, 0:1]), approx=False)   # (TB, 1)
    p1 = 1.0 - p0
    v = s[:, 1:2]                                                  # value head

    # ---- narrow lane output (TB, 8): col0=p0, col1=p1, col2=value ----
    col = jax.lax.broadcasted_iota(jnp.int32, (TB, OUT_W), 1)
    out_ref[...] = jnp.where(col == 0, p0,
                    jnp.where(col == 1, p1,
                     jnp.where(col == 2, v, 0.0)))


@jax.jit
def policy_forward(x, w1, b1, wa, ba, wv, bv):
    """x: (B, 4) f32. Returns (probs (B, 2), values (B,)) matching Policy.forward."""
    B = x.shape[0]

    # Fuse the two heads into one narrow (HID, 8) slab (fuses into the jit):
    #   col 0: action-head logit difference wa[:,0]-wa[:,1], bias ba0-ba1
    #   col 1: value head                   wv[:,0],          bias bv
    wh = jnp.concatenate(
        [wa[:, 0:1] - wa[:, 1:2], wv, jnp.zeros((HID, HEAD_W - 2), jnp.float32)],
        axis=1)
    bh = jnp.concatenate(
        [ba[:, 0:1] - ba[:, 1:2], bv, jnp.zeros((1, HEAD_W - 2), jnp.float32)],
        axis=1)

    # Balanced batch tiling: fewest tiles with near-equal sizes (no 2x padding
    # cliff); single-tile batches >= SPLIT_MIN get 2 steps so the "parallel"
    # grid axis can shard across both v7x TensorCores.
    nt = -(-B // MAX_TILE)                      # cdiv
    if nt == 1 and B >= SPLIT_MIN:
        nt = 2
    TB = ((-(-B // nt) + 7) // 8) * 8           # round_up(cdiv(B, nt), 8)
    Bp = nt * TB
    xp = x if Bp == B else jnp.pad(x, ((0, Bp - B), (0, 0)))

    out = pl.pallas_call(
        policy_kernel,
        out_shape=jax.ShapeDtypeStruct((Bp, OUT_W), jnp.float32),
        grid=(nt,),
        in_specs=[
            pl.BlockSpec((TB, 4), lambda i: (i, 0)),        # x tile
            pl.BlockSpec((4, HID), lambda i: (0, 0)),       # w1 (resident)
            pl.BlockSpec((1, HID), lambda i: (0, 0)),       # b1
            pl.BlockSpec((HID, HEAD_W), lambda i: (0, 0)),  # fused head weight
            pl.BlockSpec((1, HEAD_W), lambda i: (0, 0)),    # fused head bias
        ],
        out_specs=pl.BlockSpec((TB, OUT_W), lambda i: (i, 0)),
        compiler_params=pltpu.CompilerParams(
            dimension_semantics=("parallel",)),
    )(xp, w1, b1, wh, bh)

    probs = out[:B, 0:2]
    values = jnp.squeeze(out[:B, 2])   # matches PyTorch .squeeze() (scalar if B==1)
    return probs, values


def init_params(key):
    # Deterministic init mimicking nn.Linear's uniform(-1/sqrt(fan_in), +1/sqrt(fan_in)).
    k1, k2, k3, k4, k5, k6 = jax.random.split(key, 6)

    def u(k, shape, fan_in):
        bound = 1.0 / jnp.sqrt(fan_in)
        return jax.random.uniform(k, shape, jnp.float32, -bound, bound)

    w1 = u(k1, (4, HID), 4.0)       # affine1.weight (transposed: [in, out])
    b1 = u(k2, (1, HID), 4.0)       # affine1.bias
    wa = u(k3, (HID, 2), 128.0)     # action_head.weight (transposed)
    ba = u(k4, (1, 2), 128.0)       # action_head.bias
    wv = u(k5, (HID, 1), 128.0)     # value_head.weight (transposed)
    bv = u(k6, (1, 1), 128.0)       # value_head.bias
    return w1, b1, wa, ba, wv, bv


def reference(x, params):
    # Plain-JAX reference with the same math as the PyTorch module.
    w1, b1, wa, ba, wv, bv = params
    h = jnp.maximum(x @ w1 + b1, 0.0)
    s = h @ wa + ba
    p = jax.nn.softmax(s, axis=-1)
    v = jnp.squeeze(h @ wv + bv)
    return p, v


if __name__ == "__main__":
    key = jax.random.PRNGKey(0)
    pkey, xkey = jax.random.split(key)
    params = init_params(pkey)

    # CartPole observation has 4 features. Check a small batch (single tile)
    # and a batch >= SPLIT_MIN that exercises the 2-step padded/parallel path.
    for bsz in (8, 300):
        xk = jax.random.fold_in(xkey, bsz)
        x = jax.random.normal(xk, (bsz, 4), jnp.float32)

        probs, values = policy_forward(x, *params)
        jax.block_until_ready((probs, values))

        p_ref, v_ref = reference(x, params)
        assert probs.shape == (bsz, 2) and values.shape == (bsz,)
        assert jnp.allclose(probs, p_ref, atol=1e-5)
        assert jnp.allclose(jnp.sum(probs, axis=-1), 1.0, atol=1e-5)
        assert jnp.allclose(values, v_ref, atol=1e-5)

    print("KERNEL_OK")
</pallas_src>

<mosaic_0001>
module attributes {stable_mosaic.version = 11 : i64} {
  func.func @policy_kernel(%arg0: i32, %arg1: memref<8x4xf32, #tpu.memory_space<vmem>>, %arg2: memref<4x128xf32, #tpu.memory_space<vmem>>, %arg3: memref<1x128xf32, #tpu.memory_space<vmem>>, %arg4: memref<128x8xf32, #tpu.memory_space<vmem>>, %arg5: memref<1x8xf32, #tpu.memory_space<vmem>>, %arg6: memref<8x8xf32, #tpu.memory_space<vmem>>) attributes {dimension_semantics = [#tpu.dimension_semantics<parallel>], iteration_bounds = array<i64: 1>, scalar_prefetch = 0 : i64, scratch_operands = 0 : i64, tpu.core_type = #tpu.core_type<tc>, window_params = [{transform_indices = @transform_0, window_bounds = array<i64: 8, 4>}, {pipeline_mode = #tpu.pipeline_mode<synchronous>, transform_indices = @transform_1, window_bounds = array<i64: 4, 128>}, {pipeline_mode = #tpu.pipeline_mode<synchronous>, transform_indices = @transform_2, window_bounds = array<i64: 1, 128>}, {pipeline_mode = #tpu.pipeline_mode<synchronous>, transform_indices = @transform_3, window_bounds = array<i64: 128, 8>}, {pipeline_mode = #tpu.pipeline_mode<synchronous>, transform_indices = @transform_4, window_bounds = array<i64: 1, 8>}, {transform_indices = @transform_5, window_bounds = array<i64: 8, 8>}]} {
    %c0 = arith.constant 0 : index
    %c0_0 = arith.constant 0 : index
    %0 = vector.load %arg1[%c0, %c0_0] : memref<8x4xf32, #tpu.memory_space<vmem>>, vector<8x4xf32>
    %c0_1 = arith.constant 0 : index
    %c0_2 = arith.constant 0 : index
    %1 = vector.load %arg2[%c0_1, %c0_2] : memref<4x128xf32, #tpu.memory_space<vmem>>, vector<4x128xf32>
    %c0_3 = arith.constant 0 : index
    %c0_4 = arith.constant 0 : index
    %2 = vector.load %arg3[%c0_3, %c0_4] : memref<1x128xf32, #tpu.memory_space<vmem>>, vector<1x128xf32>
    %3 = vector.shape_cast %2 : vector<1x128xf32> to vector<1x128xf32>
    %4 = vector.broadcast %3 : vector<1x128xf32> to vector<8x128xf32>
    %5 = vector.extract_strided_slice %0 {offsets = [0, 0], sizes = [8, 1], strides = [1, 1]} : vector<8x4xf32> to vector<8x1xf32>
    %6 = vector.extract_strided_slice %1 {offsets = [0, 0], sizes = [1, 128], strides = [1, 1]} : vector<4x128xf32> to vector<1x128xf32>
    %7 = vector.broadcast %5 : vector<8x1xf32> to vector<8x128xf32>
    %8 = vector.broadcast %6 : vector<1x128xf32> to vector<8x128xf32>
    %9 = arith.mulf %7, %8 : vector<8x128xf32>
    %10 = arith.addf %4, %9 : vector<8x128xf32>
    %11 = vector.extract_strided_slice %0 {offsets = [0, 1], sizes = [8, 1], strides = [1, 1]} : vector<8x4xf32> to vector<8x1xf32>
    %12 = vector.extract_strided_slice %1 {offsets = [1, 0], sizes = [1, 128], strides = [1, 1]} : vector<4x128xf32> to vector<1x128xf32>
    %13 = vector.broadcast %11 : vector<8x1xf32> to vector<8x128xf32>
    %14 = vector.broadcast %12 : vector<1x128xf32> to vector<8x128xf32>
    %15 = arith.mulf %13, %14 : vector<8x128xf32>
    %16 = arith.addf %10, %15 : vector<8x128xf32>
    %17 = vector.extract_strided_slice %0 {offsets = [0, 2], sizes = [8, 1], strides = [1, 1]} : vector<8x4xf32> to vector<8x1xf32>
    %18 = vector.extract_strided_slice %1 {offsets = [2, 0], sizes = [1, 128], strides = [1, 1]} : vector<4x128xf32> to vector<1x128xf32>
    %19 = vector.broadcast %17 : vector<8x1xf32> to vector<8x128xf32>
    %20 = vector.broadcast %18 : vector<1x128xf32> to vector<8x128xf32>
    %21 = arith.mulf %19, %20 : vector<8x128xf32>
    %22 = arith.addf %16, %21 : vector<8x128xf32>
    %23 = vector.extract_strided_slice %0 {offsets = [0, 3], sizes = [8, 1], strides = [1, 1]} : vector<8x4xf32> to vector<8x1xf32>
    %24 = vector.extract_strided_slice %1 {offsets = [3, 0], sizes = [1, 128], strides = [1, 1]} : vector<4x128xf32> to vector<1x128xf32>
    %25 = vector.broadcast %23 : vector<8x1xf32> to vector<8x128xf32>
    %26 = vector.broadcast %24 : vector<1x128xf32> to vector<8x128xf32>
    %27 = arith.mulf %25, %26 : vector<8x128xf32>
    %28 = arith.addf %22, %27 : vector<8x128xf32>
    %cst = arith.constant 0.000000e+00 : f32
    %29 = vector.broadcast %cst : f32 to vector<8x128xf32>
    %30 = arith.maximumf %28, %29 : vector<8x128xf32>
    %c0_5 = arith.constant 0 : index
    %c0_6 = arith.constant 0 : index
    %31 = vector.load %arg4[%c0_5, %c0_6] : memref<128x8xf32, #tpu.memory_space<vmem>>, vector<128x8xf32>
    %cst_7 = arith.constant dense<0.000000e+00> : vector<8x8xf32>
    %32 = tpu.matmul %30, %31, %cst_7 {dimension_numbers = #tpu.dot_dimension_numbers<[1], [0], [0], [1], [0, 0, 1, 1], [], []>} : vector<8x128xf32>, vector<128x8xf32>, vector<8x8xf32> -> vector<8x8xf32>
    %c0_8 = arith.constant 0 : index
    %c0_9 = arith.constant 0 : index
    %33 = vector.load %arg5[%c0_8, %c0_9] : memref<1x8xf32, #tpu.memory_space<vmem>>, vector<1x8xf32>
    %34 = vector.broadcast %33 : vector<1x8xf32> to vector<8x8xf32>
    %35 = arith.addf %32, %34 : vector<8x8xf32>
    %36 = vector.extract_strided_slice %35 {offsets = [0, 0], sizes = [8, 1], strides = [1, 1]} : vector<8x8xf32> to vector<8x1xf32>
    %cst_10 = arith.constant 0.000000e+00 : f32
    %37 = vector.broadcast %cst_10 : f32 to vector<8x1xf32>
    %38 = arith.subf %37, %36 : vector<8x1xf32>
    %39 = math.exp %38 : vector<8x1xf32>
    %cst_11 = arith.constant 1.000000e+00 : f32
    %40 = vector.broadcast %cst_11 : f32 to vector<8x1xf32>
    %41 = arith.addf %40, %39 : vector<8x1xf32>
    %42 = tpu.reciprocal %41 : vector<8x1xf32> -> vector<8x1xf32>
    %cst_12 = arith.constant 1.000000e+00 : f32
    %43 = vector.broadcast %cst_12 : f32 to vector<8x1xf32>
    %44 = arith.subf %43, %42 : vector<8x1xf32>
    %45 = vector.extract_strided_slice %35 {offsets = [0, 1], sizes = [8, 1], strides = [1, 1]} : vector<8x8xf32> to vector<8x1xf32>
    %46 = tpu.iota {dimensions = array<i32: 1>} : vector<8x8xi32>
    %c0_i32 = arith.constant 0 : i32
    %47 = vector.broadcast %c0_i32 : i32 to vector<8x8xi32>
    %48 = arith.cmpi eq, %46, %47 : vector<8x8xi32>
    %c1_i32 = arith.constant 1 : i32
    %49 = vector.broadcast %c1_i32 : i32 to vector<8x8xi32>
    %50 = arith.cmpi eq, %46, %49 : vector<8x8xi32>
    %c2_i32 = arith.constant 2 : i32
    %51 = vector.broadcast %c2_i32 : i32 to vector<8x8xi32>
    %52 = arith.cmpi eq, %46, %51 : vector<8x8xi32>
    %cst_13 = arith.constant 0.000000e+00 : f32
    %53 = vector.shape_cast %45 : vector<8x1xf32> to vector<8x1xf32>
    %54 = vector.broadcast %53 : vector<8x1xf32> to vector<8x8xf32>
    %55 = vector.broadcast %cst_13 : f32 to vector<8x8xf32>
    %56 = arith.select %52, %54, %55 : vector<8x8xi1>, vector<8x8xf32>
    %57 = vector.shape_cast %44 : vector<8x1xf32> to vector<8x1xf32>
    %58 = vector.broadcast %57 : vector<8x1xf32> to vector<8x8xf32>
    %59 = arith.select %50, %58, %56 : vector<8x8xi1>, vector<8x8xf32>
    %60 = vector.shape_cast %42 : vector<8x1xf32> to vector<8x1xf32>
    %61 = vector.broadcast %60 : vector<8x1xf32> to vector<8x8xf32>
    %62 = arith.select %48, %61, %59 : vector<8x8xi1>, vector<8x8xf32>
    %c0_14 = arith.constant 0 : index
    %c0_15 = arith.constant 0 : index
    %63 = vector.load %arg6[%c0_14, %c0_15] : memref<8x8xf32, #tpu.memory_space<vmem>>, vector<8x8xf32>
    tpu.vector_store %arg6[%c0_14, %c0_15], %62 {strides = array<i32>} : memref<8x8xf32, #tpu.memory_space<vmem>>, vector<8x8xf32>,
    return
  }
  func.func @transform_0(%arg0: i32) -> (i32, i32) {
    %c0_i32 = arith.constant 0 : i32
    %c0_i32_0 = arith.constant 0 : i32
    return %arg0, %c0_i32 : i32, i32
  }
  func.func @transform_1(%arg0: i32) -> (i32, i32) {
    %c0_i32 = arith.constant 0 : i32
    %c0_i32_0 = arith.constant 0 : i32
    %c0_i32_1 = arith.constant 0 : i32
    return %c0_i32, %c0_i32_0 : i32, i32
  }
  func.func @transform_2(%arg0: i32) -> (i32, i32) {
    %c0_i32 = arith.constant 0 : i32
    %c0_i32_0 = arith.constant 0 : i32
    %c0_i32_1 = arith.constant 0 : i32
    return %c0_i32, %c0_i32_0 : i32, i32
  }
  func.func @transform_3(%arg0: i32) -> (i32, i32) {
    %c0_i32 = arith.constant 0 : i32
    %c0_i32_0 = arith.constant 0 : i32
    %c0_i32_1 = arith.constant 0 : i32
    return %c0_i32, %c0_i32_0 : i32, i32
  }
  func.func @transform_4(%arg0: i32) -> (i32, i32) {
    %c0_i32 = arith.constant 0 : i32
    %c0_i32_0 = arith.constant 0 : i32
    %c0_i32_1 = arith.constant 0 : i32
    return %c0_i32, %c0_i32_0 : i32, i32
  }
  func.func @transform_5(%arg0: i32) -> (i32, i32) {
    %c0_i32 = arith.constant 0 : i32
    %c0_i32_0 = arith.constant 0 : i32
    return %arg0, %c0_i32 : i32, i32
  }
}

</mosaic_0001>

<llo_original>
// kernel: policy_forward.1
$region0: #{policy_forward.1}
  #allocation0 [shape = 'u32[]', space=smem, size = 0x4, offset = 0x4, fixed_abs, tag = 'smem constant byte address 0x4 - core index']
  #allocation1 [shape = 'u32[144,128]{1,0:T(1,128)}', space=vmem, size = 0x12000, scoped, tag = 'internal scratch']
  %s0 = inlined_call_operand.vmem [shape: f32[8,4], index: 0, kind: input, shape index: {}]
  %s1 = inlined_call_operand.vmem [shape: f32[4,128], index: 1, kind: input, shape index: {}]
  %s2 = inlined_call_operand.vmem [shape: f32[1,128], index: 2, kind: input, shape index: {}]
  %s3 = inlined_call_operand.vmem [shape: f32[128,8], index: 3, kind: input, shape index: {}]
  %s4 = inlined_call_operand.vmem [shape: f32[1,8], index: 4, kind: input, shape index: {}]
  %s5 = inlined_call_operand.vmem [shape: f32[8,8], index: 5, kind: output, shape index: {}]
  %s6 = sld [smem:[#allocation0]]
  $region30: #{policy_forward.1} parent=0
    _
  %s8 = ssub.s32 1, %s6
  %s9 = scalar_select 0, %s8, %s6
  // Predicated region
  $region2: #{policy_forward.1} parent=0 // pred_check
    _
  $region3: #{policy_forward.1} parent=0 // pred_check_branch
    %11 = sbr.rel (0) target = $region5
  $region4: #{policy_forward.1} parent=0 // pred_region
    _
  $region5: #{policy_forward.1} parent=0 // pred_fallthru
    _
  // Predicated region
  $region6: #{policy_forward.1} parent=0 // pred_check
    _
  $region7: #{policy_forward.1} parent=0 // pred_check_branch
    %13 = sbr.rel (0) target = $region9
  $region8: #{policy_forward.1} parent=0 // pred_region
    _
  $region9: #{policy_forward.1} parent=0 // pred_fallthru
    _
  // Predicated region
  $region10: #{policy_forward.1} parent=0 // pred_check
    _
  $region11: #{policy_forward.1} parent=0 // pred_check_branch
    %15 = sbr.rel (0) target = $region13
  $region12: #{policy_forward.1} parent=0 // pred_region
    _
  $region13: #{policy_forward.1} parent=0 // pred_fallthru
    _
  // Predicated region
  $region14: #{policy_forward.1} parent=0 // pred_check
    _
  $region15: #{policy_forward.1} parent=0 // pred_check_branch
    %17 = sbr.rel (0) target = $region17
  $region16: #{policy_forward.1} parent=0 // pred_region
    _
  $region17: #{policy_forward.1} parent=0 // pred_fallthru
    _
  // Predicated region
  $region18: #{policy_forward.1} parent=0 // pred_check
    _
  $region19: #{policy_forward.1} parent=0 // pred_check_branch
    %19 = sbr.rel (0) target = $region21
  $region20: #{policy_forward.1} parent=0 // pred_region
    _
  $region21: #{policy_forward.1} parent=0 // pred_fallthru
    _
  %v20 = vld [vmem:[%s0] sm:$0xff]
  %v21 = vld [vmem:[%s1] sm:$0xf]
  %v22 = vld [vmem:[%s2] sm:$0x1]
  %v24 = vlaneseq
  %v25 = vshrl.u32 %v24, 7
  %v26 = vsub.s32 0, %v25
  %v27 = vrot.slane %v22, %v26
  %30 = vset.pattern.permute.xlu0 0
  %31 = vperm.xlu0 %30, %v20
  %v32 = vpop.permute.xlu0 %31
  %v34 = vlaneseq
  %v35 = vshrl.u32 %v34, 7
  %v36 = vsub.s32 0, %v35
  %v37 = vrot.slane %v21, %v36
  %v38 = vmul.f32 %v32, %v37
  %v39 = vadd.f32 %v27, %v38
  %40 = vset.pattern.permute.xlu0 1
  %41 = vperm.xlu0 %40, %v20
  %v42 = vpop.permute.xlu0 %41
  %v44 = vlaneseq
  %v45 = vshrl.u32 %v44, 7
  %v46 = vsub.s32 1, %v45
  %v47 = vrot.slane %v21, %v46
  %v48 = vmul.f32 %v42, %v47
  %v49 = vadd.f32 %v39, %v48
  %50 = vset.pattern.permute.xlu0 2
  %51 = vperm.xlu0 %50, %v20
  %v52 = vpop.permute.xlu0 %51
  %v54 = vlaneseq
  %v55 = vshrl.u32 %v54, 7
  %v56 = vsub.s32 2, %v55
  %v57 = vrot.slane %v21, %v56
  %v58 = vmul.f32 %v52, %v57
  %v59 = vadd.f32 %v49, %v58
  %60 = vset.pattern.permute.xlu0 3
  %61 = vperm.xlu0 %60, %v20
  %v62 = vpop.permute.xlu0 %61
  %v64 = vlaneseq
  %v65 = vshrl.u32 %v64, 7
  %v66 = vsub.s32 3, %v65
  %v67 = vrot.slane %v21, %v66
  %v68 = vmul.f32 %v62, %v67
  %v69 = vadd.f32 %v59, %v68
  %v70 = vmax.f32 %v69, 0.0
  %v71 = vld [vmem:[%s3] sm:$0xff]
  %v72 = vld [vmem:[%s3 + $0x8] sm:$0xff]
  %v73 = vld [vmem:[%s3 + $0x10] sm:$0xff]
  %v74 = vld [vmem:[%s3 + $0x18] sm:$0xff]
  %v75 = vld [vmem:[%s3 + $0x20] sm:$0xff]
  %v76 = vld [vmem:[%s3 + $0x28] sm:$0xff]
  %v77 = vld [vmem:[%s3 + $0x30] sm:$0xff]
  %v78 = vld [vmem:[%s3 + $0x38] sm:$0xff]
  %v79 = vld [vmem:[%s3 + $0x40] sm:$0xff]
  %v80 = vld [vmem:[%s3 + $0x48] sm:$0xff]
  %v81 = vld [vmem:[%s3 + $0x50] sm:$0xff]
  %v82 = vld [vmem:[%s3 + $0x58] sm:$0xff]
  %v83 = vld [vmem:[%s3 + $0x60] sm:$0xff]
  %v84 = vld [vmem:[%s3 + $0x68] sm:$0xff]
  %v85 = vld [vmem:[%s3 + $0x70] sm:$0xff]
  %v86 = vld [vmem:[%s3 + $0x78] sm:$0xff]
  %v87 = vld [vmem:[%s4] sm:$0x1]
  %v89 = vlaneseq
  %v90 = vshrl.u32 %v89, 7
  %v91 = vsub.s32 0, %v90
  %v92 = vrot.slane %v87, %v91
  %94 = vmatprep.subr.mxu0 0.0
  %95 = vmatpush1.msra.mxu0 %v71
  %96 = vmatprep.subr.mxu0 0.0
  %97 = vmatpush1.msra.mxu0 %v72
  %98 = vmatprep.subr.mxu0 0.0
  %99 = vmatpush1.msra.mxu0 %v73
  %100 = vmatprep.subr.mxu0 0.0
  %101 = vmatpush1.msra.mxu0 %v74
  %102 = vmatprep.subr.mxu0 0.0
  %103 = vmatpush1.msra.mxu0 %v75
  %104 = vmatprep.subr.mxu0 0.0
  %105 = vmatpush1.msra.mxu0 %v76
  %106 = vmatprep.subr.mxu0 0.0
  %107 = vmatpush1.msra.mxu0 %v77
  %108 = vmatprep.subr.mxu0 0.0
  %109 = vmatpush1.msra.mxu0 %v78
  %110 = vmatprep.subr.mxu0 0.0
  %111 = vmatpush1.msra.mxu0 %v79
  %112 = vmatprep.subr.mxu0 0.0
  %113 = vmatpush1.msra.mxu0 %v80
  %114 = vmatprep.subr.mxu0 0.0
  %115 = vmatpush1.msra.mxu0 %v81
  %116 = vmatprep.subr.mxu0 0.0
  %117 = vmatpush1.msra.mxu0 %v82
  %118 = vmatprep.subr.mxu0 0.0
  %119 = vmatpush1.msra.mxu0 %v83
  %120 = vmatprep.subr.mxu0 0.0
  %121 = vmatpush1.msra.mxu0 %v84
  %122 = vmatprep.subr.mxu0 0.0
  %123 = vmatpush1.msra.mxu0 %v85
  %124 = vmatprep.subr.mxu0 0.0
  %125 = vmatpush1.msra.mxu0 %v86
  %126 = vmatprep.subr.mxu0 0.0
  %127 = vmatpush1.msra.mxu0 0.0
  %128 = vmatprep.subr.mxu0 0.0
  %129 = vmatpush1.msra.mxu0 0.0
  %130 = vmatprep.subr.mxu0 0.0
  %131 = vmatpush1.msra.mxu0 0.0
  %132 = vmatprep.subr.mxu0 0.0
  %133 = vmatpush1.msra.mxu0 0.0
  %134 = vmatprep.subr.mxu0 0.0
  %135 = vmatpush1.msra.mxu0 0.0
  %136 = vmatprep.subr.mxu0 0.0
  %137 = vmatpush1.msra.mxu0 0.0
  %138 = vmatprep.subr.mxu0 0.0
  %139 = vmatpush1.msra.mxu0 0.0
  %140 = vmatprep.subr.mxu0 0.0
  %141 = vmatpush1.msra.mxu0 0.0
  %142 = vmatprep.subr.mxu0 0.0
  %143 = vmatpush1.msra.mxu0 0.0
  %144 = vmatprep.subr.mxu0 0.0
  %145 = vmatpush1.msra.mxu0 0.0
  %146 = vmatprep.subr.mxu0 0.0
  %147 = vmatpush1.msra.mxu0 0.0
  %148 = vmatprep.subr.mxu0 0.0
  %149 = vmatpush1.msra.mxu0 0.0
  %150 = vmatprep.subr.mxu0 0.0
  %151 = vmatpush1.msra.mxu0 0.0
  %152 = vmatprep.subr.mxu0 0.0
  %153 = vmatpush1.msra.mxu0 0.0
  %154 = vmatprep.subr.mxu0 0.0
  %155 = vmatpush1.msra.mxu0 0.0
  %156 = vmatprep.subr.mxu0 0.0
  %157 = vmatpush1.msra.mxu0 0.0
  %158 = vmatprep.mubr.f32.mxu0 0.0
  %159 = vmatmul.mubr.f32.gmra.mrb[0].mxu0 %v70
  %v160 = vpop.f32.mrb[0].mxu0
  %v161 = vadd.f32 %v92, %v160
  %v162 = vpop.f32.mrb[0].mxu0
  %163 = vdwg.mxu0
  %v164 = vsub.f32 0.0, %v161
  %v165 = vmul.f32 %v164, 1.442695
  %v166 = vpow.pop %v165
  %v167 = vadd.f32 %v166, 1.0
  %v168 = vrcp.pop %v167
  %v169 = vsub.f32 1.0, %v168
  %v170 = vlaneseq
  %v171 = vand.u32 %v170, 127
  %vm172 = vcmp.eq.s32.totalorder %v171, 0
  %vm173 = vcmp.eq.s32.totalorder %v171, 1
  %vm174 = vcmp.eq.s32.totalorder %v171, 2
  %176 = vset.pattern.permute.xlu0 1
  %177 = vperm.xlu0 %176, %v161
  %v178 = vpop.permute.xlu0 %177
  %v180 = vsel %vm174, %v178, 0.0
  %182 = vset.pattern.permute.xlu0 0
  %183 = vperm.xlu0 %182, %v169
  %v184 = vpop.permute.xlu0 %183
  %v186 = vsel %vm173, %v184, %v180
  %188 = vset.pattern.permute.xlu0 0
  %189 = vperm.xlu0 %188, %v168
  %v190 = vpop.permute.xlu0 %189
  %v192 = vsel %vm172, %v190, %v186
  %vm193 = vcmask 64512
  %194 = vst.msk [vmem:[%s5] sm:$0xff] %vm193, %v192
  // Predicated region
  $region22: #{policy_forward.1} parent=0 // pred_check
    _
  $region23: #{policy_forward.1} parent=0 // pred_check_branch
    %196 = sbr.rel (0) target = $region25
  $region24: #{policy_forward.1} parent=0 // pred_region
    _
  $region25: #{policy_forward.1} parent=0 // pred_fallthru
    _
  // Predicated region
  $region26: #{policy_forward.1} parent=0 // pred_check
    _
  $region27: #{policy_forward.1} parent=0 // pred_check_branch
    %198 = sbr.rel (0) target = $region29
  $region28: #{policy_forward.1} parent=0 // pred_region
    _
  $region29: #{policy_forward.1} parent=0 // pred_fallthru
    _

</llo_original>
